<compile_context>
chip_gen: v7x
topology: tpu7x:2x2x1
jax: 0.10.0
libtpu: 0.0.40
codegen_flags: <defaults>
</compile_context>

<pallas_src>
import functools
from dataclasses import dataclass

import jax
import jax.numpy as jnp
from jax.experimental import pallas as pl
from jax.experimental.pallas import tpu as pltpu


def _round_up(x, m):
    return ((x + m - 1) // m) * m


def _cdiv(a, b):
    return (a + b - 1) // b


def _tpu_info():
    """Returns (vmem_budget_bytes, num_cores) with conservative fallbacks."""
    vmem = 0
    cores = 1
    try:
        info = pltpu.get_tpu_info()
        vmem = int(getattr(info, "vmem_capacity_bytes", 0) or 0)
        cores = int(getattr(info, "num_cores", 1) or 1)
    except Exception:
        pass
    if vmem <= 0:
        vmem = 64 * 1024 * 1024          # conservative (v7x-sized) fallback
    budget = (vmem * 3) // 4             # leave ~25% headroom for the compiler
    cores = max(1, min(2, cores))
    return budget, cores


# ----------------------------------------------------------------------------
# One-time parameter preparation (bf16 cast, transpose, lane/d_ff padding).
# ----------------------------------------------------------------------------
def prepare_params(params, *, lane_pad=128, ff_pad=128):
    def linear(w):
        # torch layout (d_out, d_in) -> (d_in, d_out_pad) bf16
        d_out, d_in = w.shape
        w_t = jnp.asarray(w).T.astype(jnp.bfloat16)
        pad = _round_up(d_out, lane_pad) - d_out
        if pad:
            w_t = jnp.pad(w_t, ((0, 0), (0, pad)))
        return w_t

    ffns = []
    for layer in params["ffns"]:
        wu = jnp.asarray(layer["wu"])          # (d_ff, d_model)
        wd = jnp.asarray(layer["wd"])          # (d_model, d_ff)
        d_ff, d_model = wu.shape
        d_ff_pad = _round_up(d_ff, ff_pad)
        wu_t = wu.T.astype(jnp.bfloat16)       # (d_model, d_ff)
        wd_t = wd.T.astype(jnp.bfloat16)       # (d_ff, d_model)
        if d_ff_pad != d_ff:
            # zero-padded d_ff columns/rows contribute 0 to both the ssq and
            # the down-projection accumulation -> numerically a no-op.
            wu_t = jnp.pad(wu_t, ((0, 0), (0, d_ff_pad - d_ff)))
            wd_t = jnp.pad(wd_t, ((0, d_ff_pad - d_ff), (0, 0)))
        ffns.append({"wu_t": wu_t, "wd_t": wd_t, "d_ff": d_ff})

    return {
        "wte": jnp.asarray(params["wte"]),
        "winput_t": linear(params["winput"]),
        "winput_d_out": int(params["winput"].shape[0]),
        "woutput_t": linear(params["woutput"]),
        "woutput_d_out": int(params["woutput"].shape[0]),
        "ffns": ffns,
    }


# ----------------------------------------------------------------------------
# FFN kernels: out = [x +] wd( srmsnorm( silu( wu( srmsnorm( silu(x) ) ) ) ) )
# ----------------------------------------------------------------------------
def _ffn_resident_kernel(x_ref, wu_ref, wd_ref, o_ref, *,
                         eps, d_model, d_ff, add_residual):
    x = x_ref[...].astype(jnp.float32)
    g = x * jax.nn.sigmoid(x)                                        # silu
    nrm = jnp.sqrt(jnp.sum(g * g, axis=-1, keepdims=True))
    scale = pl.reciprocal((d_model ** -0.5) * nrm + eps, approx=True)
    xn = (g * scale).astype(wu_ref.dtype)                            # bf16

    h = jnp.dot(xn, wu_ref[...], preferred_element_type=jnp.float32)
    g2 = h * jax.nn.sigmoid(h)                                       # silu (f32)
    ssq = jnp.sum(g2 * g2, axis=-1, keepdims=True)

    acc = jnp.dot(g2.astype(wd_ref.dtype), wd_ref[...],
                  preferred_element_type=jnp.float32)
    # SRMSNorm scale is a per-row scalar -> commutes with the down-projection.
    scale2 = pl.reciprocal((d_ff ** -0.5) * jnp.sqrt(ssq) + eps, approx=True)
    out = acc * scale2
    if add_residual:
        out = out + x
    o_ref[...] = out.astype(o_ref.dtype)


def _ffn_streamed_kernel(x_ref, wu_ref, wd_ref, o_ref, xn_ref, ssq_ref,
                         *maybe_acc, eps, d_model, d_ff, add_residual):
    # When the output dtype is f32 we accumulate directly into the resident
    # output block (no acc scratch); otherwise an f32 acc scratch is passed.
    acc_ref = maybe_acc[0] if maybe_acc else o_ref
    j = pl.program_id(1)
    nj = pl.num_programs(1)

    @pl.when(j == 0)
    def _init():
        x = x_ref[...].astype(jnp.float32)
        g = x * jax.nn.sigmoid(x)                                    # silu
        nrm = jnp.sqrt(jnp.sum(g * g, axis=-1, keepdims=True))
        scale = pl.reciprocal((d_model ** -0.5) * nrm + eps, approx=True)
        xn_ref[...] = (g * scale).astype(xn_ref.dtype)               # bf16
        acc_ref[...] = jnp.zeros_like(acc_ref)
        ssq_ref[...] = jnp.zeros_like(ssq_ref)

    # up-projection tile: (tm, d_model) @ (d_model, tk_ff) -> (tm, tk_ff)
    h = jnp.dot(xn_ref[...], wu_ref[...], preferred_element_type=jnp.float32)
    g = h * jax.nn.sigmoid(h)                                        # silu (f32)
    ssq_ref[...] += jnp.sum(g * g, axis=-1, keepdims=True)

    # down-projection tile: (tm, tk_ff) @ (tk_ff, d_model) -> (tm, d_model)
    acc_ref[...] += jnp.dot(g.astype(wd_ref.dtype), wd_ref[...],
                            preferred_element_type=jnp.float32)

    @pl.when(j == nj - 1)
    def _finalize():
        # Deferred SRMSNorm over the full d_ff: scalar scale commutes with wd.
        scale = pl.reciprocal((d_ff ** -0.5) * jnp.sqrt(ssq_ref[...]) + eps,
                              approx=True)
        out = acc_ref[...].astype(jnp.float32) * scale
        if add_residual:
            out = out + x_ref[...].astype(jnp.float32)
        o_ref[...] = out.astype(o_ref.dtype)


def ffn_pallas(x, wu_t, wd_t, *, d_ff, eps, add_residual=True, tm=256,
               vmem_budget=None, force_streamed=None, tk_ff=None):
    """x: (N, d_model) f32.
    wu_t: (d_model, d_ff_pad) bf16  (pre-transposed torch wu).
    wd_t: (d_ff_pad, d_model) bf16  (pre-transposed torch wd).
    d_ff: un-padded d_ff used in the SRMSNorm scale."""
    N, d_model = x.shape
    d_model2, d_ff_pad = wu_t.shape
    assert d_model2 == d_model and wd_t.shape == (d_ff_pad, d_model)

    if vmem_budget is None:
        vmem_budget, _ = _tpu_info()

    # Row tile (caller normally pre-pads, so the pad below is a no-op).
    tm = max(16, min(tm, _round_up(N, 16)))
    tm = _round_up(tm, 16)
    n_pad = _round_up(N, tm)
    if n_pad != N:
        x = jnp.pad(x, ((0, n_pad - N), (0, 0)))
    n_row_tiles = n_pad // tm

    out_dtype = x.dtype
    itemsize = jnp.dtype(out_dtype).itemsize

    weight_bytes = 2 * d_model * d_ff_pad * 2            # wu + wd, bf16
    io_bytes = 2 * 2 * tm * d_model * itemsize           # x + out, double-buffered
    inter_bytes = tm * d_ff_pad * 4 + tm * d_model * 4   # h/g intermediate + slack

    resident = (2 * weight_bytes + io_bytes + inter_bytes) <= vmem_budget
    if force_streamed is True:
        resident = False
    elif force_streamed is False:
        resident = True

    if resident:
        kernel = functools.partial(_ffn_resident_kernel, eps=eps,
                                   d_model=d_model, d_ff=d_ff,
                                   add_residual=add_residual)
        out = pl.pallas_call(
            kernel,
            out_shape=jax.ShapeDtypeStruct((n_pad, d_model), out_dtype),
            grid_spec=pltpu.PrefetchScalarGridSpec(
                num_scalar_prefetch=0,
                grid=(n_row_tiles,),
                in_specs=[
                    pl.BlockSpec((tm, d_model), lambda i: (i, 0)),
                    pl.BlockSpec((d_model, d_ff_pad), lambda i: (0, 0)),
                    pl.BlockSpec((d_ff_pad, d_model), lambda i: (0, 0)),
                ],
                out_specs=pl.BlockSpec((tm, d_model), lambda i: (i, 0)),
            ),
            compiler_params=pltpu.CompilerParams(
                dimension_semantics=("parallel",),
                vmem_limit_bytes=vmem_budget,
            ),
            cost_estimate=pl.CostEstimate(
                flops=4 * n_pad * d_model * d_ff_pad,
                transcendentals=2 * n_pad * (d_model + d_ff_pad),
                bytes_accessed=2 * n_pad * d_model * itemsize + weight_bytes),
        )(x, wu_t, wd_t)
    else:
        if tk_ff is None:
            tk_ff = 128
            for cand in (512, 256):
                if d_ff_pad % cand != 0:
                    continue
                tile_bytes = 2 * 2 * d_model * cand * 2   # wu+wd tiles, dbl-buffered
                scratch = tm * d_model * 2 + tm * 4
                if out_dtype != jnp.float32:
                    scratch += tm * d_model * 4
                if tile_bytes + io_bytes + scratch + tm * cand * 4 <= vmem_budget:
                    tk_ff = cand
                    break
        assert d_ff_pad % tk_ff == 0
        n_ff_tiles = d_ff_pad // tk_ff

        scratch_shapes = [
            pltpu.VMEM((tm, d_model), jnp.bfloat16),      # normalized silu(x)
            pltpu.VMEM((tm, 1), jnp.float32),             # sum of squares of silu(h)
        ]
        if out_dtype != jnp.float32:
            scratch_shapes.append(pltpu.VMEM((tm, d_model), jnp.float32))

        kernel = functools.partial(_ffn_streamed_kernel, eps=eps,
                                   d_model=d_model, d_ff=d_ff,
                                   add_residual=add_residual)
        out = pl.pallas_call(
            kernel,
            out_shape=jax.ShapeDtypeStruct((n_pad, d_model), out_dtype),
            grid_spec=pltpu.PrefetchScalarGridSpec(
                num_scalar_prefetch=0,
                grid=(n_row_tiles, n_ff_tiles),
                in_specs=[
                    pl.BlockSpec((tm, d_model), lambda i, j: (i, 0)),
                    pl.BlockSpec((d_model, tk_ff), lambda i, j: (0, j)),
                    pl.BlockSpec((tk_ff, d_model), lambda i, j: (j, 0)),
                ],
                out_specs=pl.BlockSpec((tm, d_model), lambda i, j: (i, 0)),
                scratch_shapes=scratch_shapes,
            ),
            compiler_params=pltpu.CompilerParams(
                dimension_semantics=("parallel", "arbitrary"),
                vmem_limit_bytes=vmem_budget,
            ),
            cost_estimate=pl.CostEstimate(
                flops=4 * n_pad * d_model * d_ff_pad,
                transcendentals=2 * n_pad * (d_model + d_ff_pad),
                bytes_accessed=(2 * n_pad * d_model * itemsize
                                + n_row_tiles * weight_bytes)),
        )(x, wu_t, wd_t)

    if n_pad != N:
        out = out[:N]
    return out


# ----------------------------------------------------------------------------
# srmsnorm(+)linear kernel: y = [srmsnorm]( srmsnorm(x) @ W )
# Used for winput (norm_output=True) and woutput (norm_output=False).
# ----------------------------------------------------------------------------
def _srms_linear_kernel(x_ref, w_ref, o_ref, *, eps, d_in, d_out, norm_output):
    x = x_ref[...].astype(jnp.float32)
    nrm = jnp.sqrt(jnp.sum(x * x, axis=-1, keepdims=True))
    xn = (x * pl.reciprocal((d_in ** -0.5) * nrm + eps, approx=True)
          ).astype(w_ref.dtype)
    y = jnp.dot(xn, w_ref[...], preferred_element_type=jnp.float32)
    if norm_output:
        # Zero-padded output lanes contribute 0 to the norm; scale uses the
        # un-padded d_out.
        nrm2 = jnp.sqrt(jnp.sum(y * y, axis=-1, keepdims=True))
        y = y * pl.reciprocal((d_out ** -0.5) * nrm2 + eps, approx=True)
    o_ref[...] = y.astype(o_ref.dtype)


def srms_linear_pallas(x, w_t, *, d_out, eps, norm_output, tm=256,
                       vmem_budget=None):
    """x: (N, d_in); w_t: (d_in, d_out_pad) bf16 (pre-transposed, lane-padded)."""
    N, d_in = x.shape
    d_in2, d_out_pad = w_t.shape
    assert d_in2 == d_in

    if vmem_budget is None:
        vmem_budget, _ = _tpu_info()

    tm = max(16, min(tm, _round_up(N, 16)))
    tm = _round_up(tm, 16)
    n_pad = _round_up(N, tm)
    if n_pad != N:
        x = jnp.pad(x, ((0, n_pad - N), (0, 0)))

    # TODO(synk): if (d_in * d_out_pad * 2) ever exceeds the VMEM budget
    # (huge winput on v7x), add a reduction grid axis over d_in here.
    kernel = functools.partial(_srms_linear_kernel, eps=eps, d_in=d_in,
                               d_out=d_out, norm_output=norm_output)

    out = pl.pallas_call(
        kernel,
        out_shape=jax.ShapeDtypeStruct((n_pad, d_out_pad), x.dtype),
        grid_spec=pltpu.PrefetchScalarGridSpec(
            num_scalar_prefetch=0,
            grid=(n_pad // tm,),
            in_specs=[
                pl.BlockSpec((tm, d_in), lambda i: (i, 0)),
                pl.BlockSpec((d_in, d_out_pad), lambda i: (0, 0)),
            ],
            out_specs=pl.BlockSpec((tm, d_out_pad), lambda i: (i, 0)),
        ),
        compiler_params=pltpu.CompilerParams(
            dimension_semantics=("parallel",),
            vmem_limit_bytes=vmem_budget,
        ),
        cost_estimate=pl.CostEstimate(
            flops=2 * n_pad * d_in * d_out_pad,
            transcendentals=2 * n_pad,
            bytes_accessed=(n_pad * (d_in + d_out_pad) * x.dtype.itemsize
                            + d_in * d_out_pad * 2)),
    )(x, w_t)

    if n_pad != N:
        out = out[:N]
    if d_out_pad != d_out:
        out = out[:, :d_out]
    return out


# ----------------------------------------------------------------------------
# Full Starlight forward
# ----------------------------------------------------------------------------
@dataclass
class Conf:
    n_vocab: int
    d_embd: int
    n_seq: int
    d_model: int
    d_ff: int
    n_layer: int
    n_output: int
    norm_eps: float


def starlight_pallas(tokens, prep, conf, *, force_streamed=None, tk_ff=None):
    n_batch, n_seq = tokens.shape
    assert n_seq == conf.n_seq

    vmem_budget, n_cores = _tpu_info()
    tm_max = 512 if vmem_budget >= 96 * 1024 * 1024 else 256

    # TODO(synk): the embedding gather (wte lookup) stays in XLA via jnp.take;
    # a Pallas scalar-prefetch row-gather adds nothing at these sizes.
    x = jnp.take(prep["wte"], tokens, axis=0).reshape(
        n_batch, n_seq * conf.d_embd)

    # Row tiling decided once: minimal padding, >= n_cores row tiles when the
    # batch is large enough so both v7x TensorCores get work.
    n = n_batch
    n_tiles = max(_cdiv(n, tm_max), min(n_cores, _cdiv(n, 16)))
    tm = _round_up(_cdiv(n, n_tiles), 16)
    n_pad = _round_up(n, tm)

    # Pad the rows ONCE (zero rows are SRMSNorm/FFN fixed points), run the
    # whole stack padded, slice once at the end.
    if n_pad != n:
        x = jnp.pad(x, ((0, n_pad - n), (0, 0)))

    # x = ln(winput(ln(x)))
    x = srms_linear_pallas(x, prep["winput_t"], d_out=prep["winput_d_out"],
                           eps=conf.norm_eps, norm_output=True, tm=tm,
                           vmem_budget=vmem_budget)
    # residual FFN stack: x = x + ffn(x)
    for layer in prep["ffns"]:
        x = ffn_pallas(x, layer["wu_t"], layer["wd_t"], d_ff=layer["d_ff"],
                       eps=conf.norm_eps, add_residual=True, tm=tm,
                       vmem_budget=vmem_budget, force_streamed=force_streamed,
                       tk_ff=tk_ff)
    # x = woutput(ln(x))
    x = srms_linear_pallas(x, prep["woutput_t"], d_out=prep["woutput_d_out"],
                           eps=conf.norm_eps, norm_output=False, tm=tm,
                           vmem_budget=vmem_budget)
    return x[:n]


# ----------------------------------------------------------------------------
# Pure-JAX f32 reference (mirrors the PyTorch module exactly)
# ----------------------------------------------------------------------------
def _srmsnorm_ref(x, eps):
    x32 = x.astype(jnp.float32)
    nrm = jnp.sqrt(jnp.sum(x32 * x32, axis=-1, keepdims=True))
    return (x32 / (x.shape[-1] ** -0.5 * nrm + eps)).astype(x.dtype)


def _ffn_ref(x, wu, wd, eps):
    h = jax.nn.silu(x)
    h = _srmsnorm_ref(h, eps)
    h = h @ wu.T
    h = jax.nn.silu(h)
    h = _srmsnorm_ref(h, eps)
    return h @ wd.T


def starlight_reference(tokens, params, conf):
    n_batch, _ = tokens.shape
    x = jnp.take(params["wte"], tokens, axis=0).reshape(
        n_batch, conf.n_seq * conf.d_embd)
    x = _srmsnorm_ref(_srmsnorm_ref(x, conf.norm_eps) @ params["winput"].T,
                      conf.norm_eps)
    for layer in params["ffns"]:
        x = x + _ffn_ref(x, layer["wu"], layer["wd"], conf.norm_eps)
    x = _srmsnorm_ref(x, conf.norm_eps) @ params["woutput"].T
    return x


if __name__ == "__main__":
    conf = Conf(n_vocab=97, d_embd=16, n_seq=8, d_model=128, d_ff=256,
                n_layer=2, n_output=64, norm_eps=1e-6)
    n_batch = 2

    key = jax.random.PRNGKey(0)
    kt, ke, ki, ko, *kl = jax.random.split(key, 4 + 2 * conf.n_layer)

    tokens = jax.random.randint(kt, (n_batch, conf.n_seq), 0, conf.n_vocab,
                                dtype=jnp.int32)

    def init_linear(k, d_out, d_in):
        return jax.random.normal(k, (d_out, d_in), dtype=jnp.float32) * (d_in ** -0.5)

    params = {
        "wte": jax.random.normal(ke, (conf.n_vocab, conf.d_embd), dtype=jnp.float32),
        "winput": init_linear(ki, conf.d_model, conf.d_embd * conf.n_seq),
        "woutput": init_linear(ko, conf.n_output, conf.d_model),
        "ffns": [
            {"wu": init_linear(kl[2 * i], conf.d_ff, conf.d_model),
             "wd": init_linear(kl[2 * i + 1], conf.d_model, conf.d_ff)}
            for i in range(conf.n_layer)
        ],
    }

    # One-time weight prep (bf16 cast + transpose + lane/d_ff padding).
    prep = prepare_params(params)

    ref = starlight_reference(tokens, params, conf)

    # 1) Auto path: weights fit VMEM here -> resident-weight FFN kernel.
    out = jax.block_until_ready(starlight_pallas(tokens, prep, conf))
    assert out.shape == (n_batch, conf.n_output)
    assert bool(jnp.all(jnp.isfinite(out)))
    err = float(jnp.max(jnp.abs(out - ref)))
    assert jnp.allclose(out, ref, atol=5e-2, rtol=5e-2), \
        f"resident-path mismatch, max abs err {err}"

    # 2) Streamed path (d_ff reduction axis, 2 steps at tk_ff=128) to exercise
    #    the accumulation / deferred-norm kernel as well.
    out_s = jax.block_until_ready(
        starlight_pallas(tokens, prep, conf, force_streamed=True, tk_ff=128))
    err_s = float(jnp.max(jnp.abs(out_s - ref)))
    assert jnp.allclose(out_s, ref, atol=5e-2, rtol=5e-2), \
        f"streamed-path mismatch, max abs err {err_s}"

    print("KERNEL_OK")
</pallas_src>

<mosaic_0001>
module attributes {stable_mosaic.version = 11 : i64} {
  func.func @_srms_linear_kernel(%arg0: i32, %arg1: memref<16x128xf32, #tpu.memory_space<vmem>>, %arg2: memref<128x128xbf16, #tpu.memory_space<vmem>>, %arg3: memref<16x128xf32, #tpu.memory_space<vmem>>) attributes {dimension_semantics = [#tpu.dimension_semantics<parallel>], iteration_bounds = array<i64: 1>, scalar_prefetch = 0 : i64, scratch_operands = 0 : i64, tpu.core_type = #tpu.core_type<tc>, window_params = [{transform_indices = @transform_0, window_bounds = array<i64: 16, 128>}, {pipeline_mode = #tpu.pipeline_mode<synchronous>, transform_indices = @transform_1, window_bounds = array<i64: 128, 128>}, {transform_indices = @transform_2, window_bounds = array<i64: 16, 128>}]} {
    %c0 = arith.constant 0 : index
    %c0_0 = arith.constant 0 : index
    %0 = vector.load %arg1[%c0, %c0_0] : memref<16x128xf32, #tpu.memory_space<vmem>>, vector<16x128xf32>
    %1 = arith.mulf %0, %0 : vector<16x128xf32>
    %cst = arith.constant dense<0.000000e+00> : vector<16xf32>
    %2 = vector.multi_reduction <add>, %1, %cst [1] : vector<16x128xf32> to vector<16xf32>
    %3 = vector.shape_cast %2 : vector<16xf32> to vector<16x1xf32>
    %4 = math.sqrt %3 : vector<16x1xf32>
    %cst_1 = arith.constant 0.0883883461 : f32
    %5 = vector.broadcast %cst_1 : f32 to vector<16x1xf32>
    %6 = arith.mulf %5, %4 : vector<16x1xf32>
    %cst_2 = arith.constant 9.99999997E-7 : f32
    %7 = vector.broadcast %cst_2 : f32 to vector<16x1xf32>
    %8 = arith.addf %6, %7 : vector<16x1xf32>
    %9 = tpu.reciprocal %8 {approx = true} : vector<16x1xf32> -> vector<16x1xf32>
    %10 = vector.broadcast %9 : vector<16x1xf32> to vector<16x128xf32>
    %11 = arith.mulf %0, %10 : vector<16x128xf32>
    %12 = arith.truncf %11 : vector<16x128xf32> to vector<16x128xbf16>
    %c0_3 = arith.constant 0 : index
    %c0_4 = arith.constant 0 : index
    %13 = vector.load %arg2[%c0_3, %c0_4] : memref<128x128xbf16, #tpu.memory_space<vmem>>, vector<128x128xbf16>
    %cst_5 = arith.constant dense<0.000000e+00> : vector<16x128xf32>
    %14 = tpu.matmul %12, %13, %cst_5 {dimension_numbers = #tpu.dot_dimension_numbers<[1], [0], [0], [1], [0, 0, 1, 1], [], []>} : vector<16x128xbf16>, vector<128x128xbf16>, vector<16x128xf32> -> vector<16x128xf32>
    %15 = arith.mulf %14, %14 : vector<16x128xf32>
    %cst_6 = arith.constant dense<0.000000e+00> : vector<16xf32>
    %16 = vector.multi_reduction <add>, %15, %cst_6 [1] : vector<16x128xf32> to vector<16xf32>
    %17 = vector.shape_cast %16 : vector<16xf32> to vector<16x1xf32>
    %18 = math.sqrt %17 : vector<16x1xf32>
    %cst_7 = arith.constant 0.0883883461 : f32
    %19 = vector.broadcast %cst_7 : f32 to vector<16x1xf32>
    %20 = arith.mulf %19, %18 : vector<16x1xf32>
    %cst_8 = arith.constant 9.99999997E-7 : f32
    %21 = vector.broadcast %cst_8 : f32 to vector<16x1xf32>
    %22 = arith.addf %20, %21 : vector<16x1xf32>
    %23 = tpu.reciprocal %22 {approx = true} : vector<16x1xf32> -> vector<16x1xf32>
    %24 = vector.broadcast %23 : vector<16x1xf32> to vector<16x128xf32>
    %25 = arith.mulf %14, %24 : vector<16x128xf32>
    %c0_9 = arith.constant 0 : index
    %c0_10 = arith.constant 0 : index
    %26 = vector.load %arg3[%c0_9, %c0_10] : memref<16x128xf32, #tpu.memory_space<vmem>>, vector<16x128xf32>
    tpu.vector_store %arg3[%c0_9, %c0_10], %25 {strides = array<i32>} : memref<16x128xf32, #tpu.memory_space<vmem>>, vector<16x128xf32>,
    return
  }
  func.func @transform_0(%arg0: i32) -> (i32, i32) {
    %c0_i32 = arith.constant 0 : i32
    %c0_i32_0 = arith.constant 0 : i32
    return %arg0, %c0_i32 : i32, i32
  }
  func.func @transform_1(%arg0: i32) -> (i32, i32) {
    %c0_i32 = arith.constant 0 : i32
    %c0_i32_0 = arith.constant 0 : i32
    %c0_i32_1 = arith.constant 0 : i32
    return %c0_i32, %c0_i32_0 : i32, i32
  }
  func.func @transform_2(%arg0: i32) -> (i32, i32) {
    %c0_i32 = arith.constant 0 : i32
    %c0_i32_0 = arith.constant 0 : i32
    return %arg0, %c0_i32 : i32, i32
  }
}

</mosaic_0001>

<llo_original>
// kernel: tpu_custom_call.1
$region0: #{tpu_custom_call.1}
  #allocation0 [shape = 'u32[]', space=smem, size = 0x4, offset = 0x4, fixed_abs, tag = 'smem constant byte address 0x4 - core index']
  #allocation1 [shape = 'u32[144,128]{1,0:T(1,128)}', space=vmem, size = 0x12000, scoped, tag = 'internal scratch']
  %s0 = inlined_call_operand.hbm [shape: f32[16,128], index: 0, kind: input, shape index: {}]
  %s1 = inlined_call_operand.hbm [shape: bf16[128,128], index: 1, kind: input, shape index: {}]
  %s2 = inlined_call_operand.hbm [shape: f32[16,128], index: 2, kind: output, shape index: {}]
  %s3 = sld [smem:[#allocation0]]
  $region26: #{tpu_custom_call.1} parent=0
    _
  %s5 = ssub.s32 1, %s3
  %s6 = scalar_select 0, %s5, %s3
  $region1: #{tpu_custom_call.1} parent=0
    #allocation2 [shape = 'u8[8192]{0}', space=vmem, size = 0x2000, scoped, tag = 'input window, operand 0, single buffered']
    #allocation3 [shape = 's32[1]{0}', space=sflag, size = 0x4, scoped, tag = 'scoped memory for tpu_custom_call.1']
    #allocation4 [shape = 's32[1]{0}', space=sflag, size = 0x4, scoped, tag = 'scoped memory for tpu_custom_call.1']
    #allocation5 [shape = 'u8[32768]{0}', space=vmem, size = 0x8000, scoped, tag = 'input window, operand 1, single buffered']
    #allocation6 [shape = 's32[1]{0}', space=sflag, size = 0x4, scoped, tag = 'scoped memory for tpu_custom_call.1']
    #allocation7 [shape = 'u8[8192]{0}', space=vmem, size = 0x2000, scoped, tag = 'output window, operand 0, single buffered']
    %7 = vsyncpa [#allocation3], 0
    %8 = vsyncpa [#allocation6], 0
    %9 = vsyncpa [#allocation4], 0
    // Predicated region
    $region2: #{tpu_custom_call.1} parent=1 // pred_check
      _
    $region3: #{tpu_custom_call.1} parent=1 // pred_check_branch
      %11 = sbr.rel (0) target = $region5
    $region4: #{tpu_custom_call.1} parent=1 // pred_region
      %s13 = ssub.s32 256, 256
      %14 = vsyncadd [#allocation3], %s13
      %s15 = sshll.u32 [#allocation2], 4
      %s16 = int_to_ptr.vmem [resolvable:$true] %s15
      %21 = dma.hbm_to_vmem [thread:$0]  %s0, 256, %s16, [#allocation3], 128, 128, 8
    $region5: #{tpu_custom_call.1} parent=1 // pred_fallthru
      _
    // Predicated region
    $region6: #{tpu_custom_call.1} parent=1 // pred_check
      _
    $region7: #{tpu_custom_call.1} parent=1 // pred_check_branch
      %23 = sbr.rel (0) target = $region9
    $region8: #{tpu_custom_call.1} parent=1 // pred_region
      %s25 = ssub.s32 1024, 1024
      %26 = vsyncadd [#allocation6], %s25
      %s27 = sshll.u32 [#allocation5], 4
      %s28 = int_to_ptr.vmem [resolvable:$true] %s27
      %33 = dma.hbm_to_vmem [thread:$0]  %s1, 1024, %s28, [#allocation6], 64, 64, 4
    $region9: #{tpu_custom_call.1} parent=1 // pred_fallthru
      _
    // Predicated region
    $region10: #{tpu_custom_call.1} parent=1 // pred_check
      _
    $region11: #{tpu_custom_call.1} parent=1 // pred_check_branch
      %35 = sbr.rel (0) target = $region13
    $region12: #{tpu_custom_call.1} parent=1 // pred_region
      %36 = dma.done [#allocation3], 256
    $region13: #{tpu_custom_call.1} parent=1 // pred_fallthru
      _
    // Predicated region
    $region14: #{tpu_custom_call.1} parent=1 // pred_check
      _
    $region15: #{tpu_custom_call.1} parent=1 // pred_check_branch
      %38 = sbr.rel (0) target = $region17
    $region16: #{tpu_custom_call.1} parent=1 // pred_region
      %39 = dma.done [#allocation6], 1024
    $region17: #{tpu_custom_call.1} parent=1 // pred_fallthru
      _
    %v41 = vld [vmem:[#allocation2] sm:$0xff]
    %v42 = vld [vmem:[#allocation2 + $0x8] sm:$0xff]
    %v43 = vmul.f32 %v41, %v41
    %v44 = vmul.f32 %v42, %v42
    %45 = vadd.xlane.f32.xlu0 %v43
    %v46 = vpop.xlane.xlu0 %45
    %47 = vadd.xlane.f32.xlu0 %v44
    %v48 = vpop.xlane.xlu0 %47
    %v49 = vrsqrt.pop %v46
    %v50 = vmul.f32 %v46, %v49
    %vm51 = vcmp.eq.f32.partialorder %v46, inf
    %v52 = vsel %vm51, %v46, %v50
    %vm53 = vcmp.eq.f32.partialorder %v46, 0.0
    %v54 = vand.u32 %v46, 2147483648
    %v55 = vsel %vm53, %v54, %v52
    %v56 = vrsqrt.pop %v48
    %v57 = vmul.f32 %v48, %v56
    %vm58 = vcmp.eq.f32.partialorder %v48, inf
    %v59 = vsel %vm58, %v48, %v57
    %vm60 = vcmp.eq.f32.partialorder %v48, 0.0
    %v61 = vand.u32 %v48, 2147483648
    %v62 = vsel %vm60, %v61, %v59
    %v63 = vmul.f32 %v55, 0.088388346
    %v64 = vmul.f32 %v62, 0.088388346
    %v65 = vadd.f32 %v63, 1e-06
    %v66 = vadd.f32 %v64, 1e-06
    %v67 = vrcp.pop %v65
    %v68 = vrcp.pop %v66
    %v69 = vmul.f32 %v41, %v67
    %v70 = vmul.f32 %v42, %v68
    %v71 = vpack.c.bf16 %v70, %v69
    %v72 = vld [vmem:[#allocation5] sm:$0xf]
    %v73 = vld [vmem:[#allocation5 + $0x4] sm:$0xf]
    %v74 = vld [vmem:[#allocation5 + $0x8] sm:$0xf]
    %v75 = vld [vmem:[#allocation5 + $0xc] sm:$0xf]
    %v76 = vld [vmem:[#allocation5 + $0x10] sm:$0xf]
    %v77 = vld [vmem:[#allocation5 + $0x14] sm:$0xf]
    %v78 = vld [vmem:[#allocation5 + $0x18] sm:$0xf]
    %v79 = vld [vmem:[#allocation5 + $0x1c] sm:$0xf]
    %v80 = vld [vmem:[#allocation5 + $0x20] sm:$0xf]
    %v81 = vld [vmem:[#allocation5 + $0x24] sm:$0xf]
    %v82 = vld [vmem:[#allocation5 + $0x28] sm:$0xf]
    %v83 = vld [vmem:[#allocation5 + $0x2c] sm:$0xf]
    %v84 = vld [vmem:[#allocation5 + $0x30] sm:$0xf]
    %v85 = vld [vmem:[#allocation5 + $0x34] sm:$0xf]
    %v86 = vld [vmem:[#allocation5 + $0x38] sm:$0xf]
    %v87 = vld [vmem:[#allocation5 + $0x3c] sm:$0xf]
    %v104 = vunpack.c.l.b16 %v72
    %v105 = vunpack.c.l.b16 %v73
    %v106 = vunpack.c.l.b16 %v74
    %v107 = vunpack.c.l.b16 %v75
    %v108 = vunpack.c.l.b16 %v76
    %v109 = vunpack.c.l.b16 %v77
    %v110 = vunpack.c.l.b16 %v78
    %v111 = vunpack.c.l.b16 %v79
    %v112 = vunpack.c.l.b16 %v80
    %v113 = vunpack.c.l.b16 %v81
    %v114 = vunpack.c.l.b16 %v82
    %v115 = vunpack.c.l.b16 %v83
    %v116 = vunpack.c.l.b16 %v84
    %v117 = vunpack.c.l.b16 %v85
    %v118 = vunpack.c.l.b16 %v86
    %v119 = vunpack.c.l.b16 %v87
    %v120 = vpack.c.b16 %v105, %v104
    %v121 = vpack.c.b16 %v107, %v106
    %v122 = vpack.c.b16 %v109, %v108
    %v123 = vpack.c.b16 %v111, %v110
    %v124 = vpack.c.b16 %v113, %v112
    %v125 = vpack.c.b16 %v115, %v114
    %v126 = vpack.c.b16 %v117, %v116
    %v127 = vpack.c.b16 %v119, %v118
    %136 = vmatprep.subr.bf16.mxu0 0
    %137 = vmatpush1.bf16.msra.mxu0 %v120
    %138 = vmatprep.subr.bf16.mxu0 0
    %139 = vmatpush1.bf16.msra.mxu0 %v121
    %140 = vmatprep.subr.bf16.mxu0 0
    %141 = vmatpush1.bf16.msra.mxu0 %v122
    %142 = vmatprep.subr.bf16.mxu0 0
    %143 = vmatpush1.bf16.msra.mxu0 %v123
    %144 = vmatprep.subr.bf16.mxu0 0
    %145 = vmatpush1.bf16.msra.mxu0 %v124
    %146 = vmatprep.subr.bf16.mxu0 0
    %147 = vmatpush1.bf16.msra.mxu0 %v125
    %148 = vmatprep.subr.bf16.mxu0 0
    %149 = vmatpush1.bf16.msra.mxu0 %v126
    %150 = vmatprep.subr.bf16.mxu0 0
    %151 = vmatpush1.bf16.msra.mxu0 %v127
    %152 = vmatprep.subr.bf16.mxu0 0
    %153 = vmatpush1.bf16.msra.mxu0 0
    %154 = vmatprep.subr.bf16.mxu0 0
    %155 = vmatpush1.bf16.msra.mxu0 0
    %156 = vmatprep.subr.bf16.mxu0 0
    %157 = vmatpush1.bf16.msra.mxu0 0
    %158 = vmatprep.subr.bf16.mxu0 0
    %159 = vmatpush1.bf16.msra.mxu0 0
    %160 = vmatprep.subr.bf16.mxu0 0
    %161 = vmatpush1.bf16.msra.mxu0 0
    %162 = vmatprep.subr.bf16.mxu0 0
    %163 = vmatpush1.bf16.msra.mxu0 0
    %164 = vmatprep.subr.bf16.mxu0 0
    %165 = vmatpush1.bf16.msra.mxu0 0
    %166 = vmatprep.subr.bf16.mxu0 0
    %167 = vmatpush1.bf16.msra.mxu0 0
    %168 = vmatprep.mubr.bf16.mxu0 0
    %169 = vmatmul.mubr.bf16.gmra.mrb[0].mxu0 %v71
    %v170 = vpop.f32.mrb[0].mxu0
    %v171 = vadd.f32 0.0, %v170
    %v172 = vpop.f32.mrb[0].mxu0
    %v173 = vpop.f32.mrb[0].mxu0
    %v174 = vadd.f32 0.0, %v173
    %v175 = vpop.f32.mrb[0].mxu0
    %176 = vdwg.mxu0
    %v177 = vmul.f32 %v171, %v171
    %v178 = vmul.f32 %v174, %v174
    %179 = vadd.xlane.f32.xlu0 %v177
    %v180 = vpop.xlane.xlu0 %179
    %181 = vadd.xlane.f32.xlu0 %v178
    %v182 = vpop.xlane.xlu0 %181
    %v183 = vrsqrt.pop %v180
    %v184 = vmul.f32 %v180, %v183
    %vm185 = vcmp.eq.f32.partialorder %v180, inf
    %v186 = vsel %vm185, %v180, %v184
    %vm187 = vcmp.eq.f32.partialorder %v180, 0.0
    %v188 = vand.u32 %v180, 2147483648
    %v189 = vsel %vm187, %v188, %v186
    %v190 = vrsqrt.pop %v182
    %v191 = vmul.f32 %v182, %v190
    %vm192 = vcmp.eq.f32.partialorder %v182, inf
    %v193 = vsel %vm192, %v182, %v191
    %vm194 = vcmp.eq.f32.partialorder %v182, 0.0
    %v195 = vand.u32 %v182, 2147483648
    %v196 = vsel %vm194, %v195, %v193
    %v197 = vmul.f32 %v189, 0.088388346
    %v198 = vmul.f32 %v196, 0.088388346
    %v199 = vadd.f32 %v197, 1e-06
    %v200 = vadd.f32 %v198, 1e-06
    %v201 = vrcp.pop %v199
    %v202 = vrcp.pop %v200
    %v203 = vmul.f32 %v171, %v201
    %v204 = vmul.f32 %v174, %v202
    %205 = vst [vmem:[#allocation7] sm:$0xff] %v203
    %206 = vst [vmem:[#allocation7 + $0x8] sm:$0xff] %v204
    // Predicated region
    $region18: #{tpu_custom_call.1} parent=1 // pred_check
      _
    $region19: #{tpu_custom_call.1} parent=1 // pred_check_branch
      %208 = sbr.rel (0) target = $region21
    $region20: #{tpu_custom_call.1} parent=1 // pred_region
      %s210 = ssub.s32 256, 256
      %211 = vsyncadd [#allocation4], %s210
      %s212 = sshll.u32 [#allocation7], 4
      %s213 = int_to_ptr.vmem [resolvable:$true] %s212
      %218 = dma.vmem_to_hbm [thread:$0]  %s213, 256, %s2, [#allocation4], 128, 128, 8
    $region21: #{tpu_custom_call.1} parent=1 // pred_fallthru
      _
    // Predicated region
    $region22: #{tpu_custom_call.1} parent=1 // pred_check
      _
    $region23: #{tpu_custom_call.1} parent=1 // pred_check_branch
      %220 = sbr.rel (0) target = $region25
    $region24: #{tpu_custom_call.1} parent=1 // pred_region
      %221 = dma.done [#allocation4], 256
    $region25: #{tpu_custom_call.1} parent=1 // pred_fallthru
      _
    %222 = vsyncpa [#allocation3], 1
    %223 = vsyncpa [#allocation6], 1
    %224 = vsyncpa [#allocation4], 1

</llo_original>
